<compile_context>
chip_gen: v6e
topology: v6e:2x2x1
jax: 0.10.0
libtpu: 0.0.40
codegen_flags: <defaults>
</compile_context>

<pallas_src>
import jax
import jax.numpy as jnp
from jax.experimental import pallas as pl
from jax.experimental.pallas import tpu as pltpu


def _att_layer_kernel(x_ref, w1_ref, b1_ref, w2_ref, b2_ref, y_ref, a_ref):
    # x_ref:  [TB, S, E]  batch tile of the input sequences
    # w1_ref: [E, H]      first Linear weight (math orientation: h = x @ W1 + b1)
    # b1_ref: [1, H]
    # w2_ref: [1, H]      second Linear weight flattened to a row vector
    # b2_ref: [1, 1]
    # y_ref:  [TB, E]     pooled output
    # a_ref:  [TB, S, 1]  attention weights
    x = x_ref[...].astype(jnp.float32)
    w1 = w1_ref[...].astype(jnp.float32)
    b1 = b1_ref[...].astype(jnp.float32)
    w2 = w2_ref[...].astype(jnp.float32)
    b2 = b2_ref[...].astype(jnp.float32)

    tb, s, e = x.shape

    # ---- attention scores: tanh(x @ W1 + b1) @ W2 + b2 --------------------
    # Collapse (TB, S) -> one MXU matmul; lane dim (E) untouched so the
    # reshape is a layout no-op.
    xf = x.reshape(tb * s, e)
    h = jnp.tanh(
        jnp.dot(xf, w1, preferred_element_type=jnp.float32) + b1
    )                                                        # [TB*S, H]
    # Output width of the second Linear is 1: elementwise mult + lane reduce
    # (VPU/XLU) instead of an N=1 matmul.
    logits = jnp.sum(h * w2, axis=-1, keepdims=True) + b2    # [TB*S, 1]
    logits = logits.reshape(tb, s, 1)

    # ---- softmax over the sequence axis (dim=-2) ---------------------------
    m = jnp.max(logits, axis=1, keepdims=True)
    p = jnp.exp(logits - m)                                  # EUP
    attn = p / jnp.sum(p, axis=1, keepdims=True)             # [TB, S, 1]

    # ---- weighted pooling over the sequence axis ---------------------------
    y = jnp.sum(x * attn, axis=1)                            # [TB, E]

    y_ref[...] = y.astype(y_ref.dtype)
    a_ref[...] = attn.astype(a_ref.dtype)


def att_layer_forward(x, w1, b1, w2, b2, *, batch_tile=None):
    """Pallas AttLayer forward.

    x:  [B, S, E]  (batch, sequence, word_emb_dim)
    w1: [E, H], b1: [H]   first Linear   (h = x @ w1 + b1)
    w2: [H, 1], b2: [1]   second Linear  (scores = h @ w2 + b2)
    returns (y [B, E], attention_weight [B, S, 1])
    """
    B, S, E = x.shape
    H = w1.shape[1]

    if batch_tile is None:
        batch_tile = B if B <= 8 else 8
    TB = batch_tile
    assert B % TB == 0, "batch must be divisible by the batch tile"
    assert TB == B or TB % 8 == 0, "batch tile must be 8-aligned (sublane rule)"

    b1r = b1.reshape(1, H)
    w2r = w2.reshape(1, H)
    b2r = jnp.asarray(b2, dtype=x.dtype).reshape(1, 1)

    y, attn = pl.pallas_call(
        _att_layer_kernel,
        out_shape=(
            jax.ShapeDtypeStruct((B, E), x.dtype),
            jax.ShapeDtypeStruct((B, S, 1), x.dtype),
        ),
        grid=(B // TB,),
        in_specs=[
            pl.BlockSpec((TB, S, E), lambda b: (b, 0, 0)),
            pl.BlockSpec((E, H), lambda b: (0, 0)),
            pl.BlockSpec((1, H), lambda b: (0, 0)),
            pl.BlockSpec((1, H), lambda b: (0, 0)),
            pl.BlockSpec((1, 1), lambda b: (0, 0)),
        ],
        out_specs=(
            pl.BlockSpec((TB, E), lambda b: (b, 0)),
            pl.BlockSpec((TB, S, 1), lambda b: (b, 0, 0)),
        ),
        compiler_params=pltpu.CompilerParams(
            dimension_semantics=("parallel",),
            vmem_limit_bytes=32 * 1024 * 1024,
        ),
    )(x, w1, b1r, w2r, b2r)
    return y, attn


def att_layer_reference(x, w1, b1, w2, b2):
    """Pure-JAX reference mirroring the PyTorch forward."""
    h = jnp.tanh(x @ w1 + b1)                 # [B, S, H]
    scores = h @ w2 + b2                      # [B, S, 1]
    attn = jax.nn.softmax(scores, axis=-2)    # softmax over the sequence axis
    y = jnp.sum(x * attn, axis=-2)            # [B, E]
    return y, attn


if __name__ == "__main__":
    key = jax.random.PRNGKey(0)
    kx, k1, k2, k3, k4 = jax.random.split(key, 5)

    # batch=16, seq=8, word_emb_dim=32, attention_hidden_dim=16
    B, S, E, H = 16, 8, 32, 16

    x = jax.random.normal(kx, (B, S, E), dtype=jnp.float32)
    w1 = jax.random.normal(k1, (E, H), dtype=jnp.float32) / jnp.sqrt(E)
    b1 = 0.1 * jax.random.normal(k2, (H,), dtype=jnp.float32)
    w2 = jax.random.normal(k3, (H, 1), dtype=jnp.float32) / jnp.sqrt(H)
    b2 = 0.1 * jax.random.normal(k4, (1,), dtype=jnp.float32)

    y, attn = att_layer_forward(x, w1, b1, w2, b2, batch_tile=8)
    y = jax.block_until_ready(y)
    attn = jax.block_until_ready(attn)

    y_ref, attn_ref = att_layer_reference(x, w1, b1, w2, b2)
    assert y.shape == (B, E) and attn.shape == (B, S, 1)
    assert jnp.allclose(attn, attn_ref, atol=1e-4, rtol=1e-4), "attention weight mismatch"
    assert jnp.allclose(y, y_ref, atol=1e-4, rtol=1e-4), "pooled output mismatch"
    assert jnp.allclose(jnp.sum(attn, axis=1), 1.0, atol=1e-5), "softmax not normalized"

    print("KERNEL_OK")
</pallas_src>

<mosaic_0001>
module attributes {stable_mosaic.version = 11 : i64} {
  func.func @_att_layer_kernel(%arg0: i32, %arg1: memref<8x8x32xf32, #tpu.memory_space<vmem>>, %arg2: memref<32x16xf32, #tpu.memory_space<vmem>>, %arg3: memref<1x16xf32, #tpu.memory_space<vmem>>, %arg4: memref<1x16xf32, #tpu.memory_space<vmem>>, %arg5: memref<1x1xf32, #tpu.memory_space<vmem>>, %arg6: memref<8x32xf32, #tpu.memory_space<vmem>>, %arg7: memref<8x8x1xf32, #tpu.memory_space<vmem>>) attributes {dimension_semantics = [#tpu.dimension_semantics<parallel>], iteration_bounds = array<i64: 2>, scalar_prefetch = 0 : i64, scratch_operands = 0 : i64, tpu.core_type = #tpu.core_type<tc>, window_params = [{transform_indices = @transform_0, window_bounds = array<i64: 8, 8, 32>}, {pipeline_mode = #tpu.pipeline_mode<synchronous>, transform_indices = @transform_1, window_bounds = array<i64: 32, 16>}, {pipeline_mode = #tpu.pipeline_mode<synchronous>, transform_indices = @transform_2, window_bounds = array<i64: 1, 16>}, {pipeline_mode = #tpu.pipeline_mode<synchronous>, transform_indices = @transform_3, window_bounds = array<i64: 1, 16>}, {pipeline_mode = #tpu.pipeline_mode<synchronous>, transform_indices = @transform_4, window_bounds = array<i64: 1, 1>}, {transform_indices = @transform_5, window_bounds = array<i64: 8, 32>}, {transform_indices = @transform_6, window_bounds = array<i64: 8, 8, 1>}]} {
    %c0 = arith.constant 0 : index
    %c0_0 = arith.constant 0 : index
    %c0_1 = arith.constant 0 : index
    %0 = vector.load %arg1[%c0, %c0_0, %c0_1] : memref<8x8x32xf32, #tpu.memory_space<vmem>>, vector<8x8x32xf32>
    %c0_2 = arith.constant 0 : index
    %c0_3 = arith.constant 0 : index
    %1 = vector.load %arg2[%c0_2, %c0_3] : memref<32x16xf32, #tpu.memory_space<vmem>>, vector<32x16xf32>
    %c0_4 = arith.constant 0 : index
    %c0_5 = arith.constant 0 : index
    %2 = vector.load %arg3[%c0_4, %c0_5] : memref<1x16xf32, #tpu.memory_space<vmem>>, vector<1x16xf32>
    %c0_6 = arith.constant 0 : index
    %c0_7 = arith.constant 0 : index
    %3 = vector.load %arg4[%c0_6, %c0_7] : memref<1x16xf32, #tpu.memory_space<vmem>>, vector<1x16xf32>
    %c0_8 = arith.constant 0 : index
    %c0_9 = arith.constant 0 : index
    %4 = vector.load %arg5[%c0_8, %c0_9] : memref<1x1xf32, #tpu.memory_space<vmem>>, vector<1x1xf32>
    %5 = vector.shape_cast %0 : vector<8x8x32xf32> to vector<64x32xf32>
    %cst = arith.constant dense<0.000000e+00> : vector<64x16xf32>
    %6 = tpu.matmul %5, %1, %cst {dimension_numbers = #tpu.dot_dimension_numbers<[1], [0], [0], [1], [0, 0, 1, 1], [], []>} : vector<64x32xf32>, vector<32x16xf32>, vector<64x16xf32> -> vector<64x16xf32>
    %7 = vector.broadcast %2 : vector<1x16xf32> to vector<64x16xf32>
    %8 = arith.addf %6, %7 : vector<64x16xf32>
    %9 = math.tanh %8 : vector<64x16xf32>
    %10 = vector.broadcast %3 : vector<1x16xf32> to vector<64x16xf32>
    %11 = arith.mulf %9, %10 : vector<64x16xf32>
    %cst_10 = arith.constant dense<0.000000e+00> : vector<64xf32>
    %12 = vector.multi_reduction <add>, %11, %cst_10 [1] : vector<64x16xf32> to vector<64xf32>
    %13 = vector.shape_cast %12 : vector<64xf32> to vector<64x1xf32>
    %14 = vector.broadcast %4 : vector<1x1xf32> to vector<64x1xf32>
    %15 = arith.addf %13, %14 : vector<64x1xf32>
    %16 = vector.shape_cast %15 : vector<64x1xf32> to vector<8x8x1xf32>
    %cst_11 = arith.constant dense<0xFF800000> : vector<8x1xf32>
    %17 = vector.multi_reduction <maximumf>, %16, %cst_11 [1] : vector<8x8x1xf32> to vector<8x1xf32>
    %18 = vector.shape_cast %17 : vector<8x1xf32> to vector<8x1x1xf32>
    %19 = vector.broadcast %18 : vector<8x1x1xf32> to vector<8x8x1xf32>
    %20 = arith.subf %16, %19 : vector<8x8x1xf32>
    %21 = math.exp %20 : vector<8x8x1xf32>
    %cst_12 = arith.constant dense<0.000000e+00> : vector<8x1xf32>
    %22 = vector.multi_reduction <add>, %21, %cst_12 [1] : vector<8x8x1xf32> to vector<8x1xf32>
    %23 = vector.shape_cast %22 : vector<8x1xf32> to vector<8x1x1xf32>
    %24 = vector.broadcast %23 : vector<8x1x1xf32> to vector<8x8x1xf32>
    %25 = arith.divf %21, %24 : vector<8x8x1xf32>
    %26 = vector.broadcast %25 : vector<8x8x1xf32> to vector<8x8x32xf32>
    %27 = arith.mulf %0, %26 : vector<8x8x32xf32>
    %cst_13 = arith.constant dense<0.000000e+00> : vector<8x32xf32>
    %28 = vector.multi_reduction <add>, %27, %cst_13 [1] : vector<8x8x32xf32> to vector<8x32xf32>
    %c0_14 = arith.constant 0 : index
    %c0_15 = arith.constant 0 : index
    %29 = vector.load %arg6[%c0_14, %c0_15] : memref<8x32xf32, #tpu.memory_space<vmem>>, vector<8x32xf32>
    tpu.vector_store %arg6[%c0_14, %c0_15], %28 {strides = array<i32>} : memref<8x32xf32, #tpu.memory_space<vmem>>, vector<8x32xf32>,
    %c0_16 = arith.constant 0 : index
    %c0_17 = arith.constant 0 : index
    %c0_18 = arith.constant 0 : index
    %30 = vector.load %arg7[%c0_16, %c0_17, %c0_18] : memref<8x8x1xf32, #tpu.memory_space<vmem>>, vector<8x8x1xf32>
    tpu.vector_store %arg7[%c0_16, %c0_17, %c0_18], %25 {strides = array<i32>} : memref<8x8x1xf32, #tpu.memory_space<vmem>>, vector<8x8x1xf32>,
    return
  }
  func.func @transform_0(%arg0: i32) -> (i32, i32, i32) {
    %c0_i32 = arith.constant 0 : i32
    %c0_i32_0 = arith.constant 0 : i32
    %c0_i32_1 = arith.constant 0 : i32
    return %arg0, %c0_i32, %c0_i32_0 : i32, i32, i32
  }
  func.func @transform_1(%arg0: i32) -> (i32, i32) {
    %c0_i32 = arith.constant 0 : i32
    %c0_i32_0 = arith.constant 0 : i32
    %c0_i32_1 = arith.constant 0 : i32
    return %c0_i32, %c0_i32_0 : i32, i32
  }
  func.func @transform_2(%arg0: i32) -> (i32, i32) {
    %c0_i32 = arith.constant 0 : i32
    %c0_i32_0 = arith.constant 0 : i32
    %c0_i32_1 = arith.constant 0 : i32
    return %c0_i32, %c0_i32_0 : i32, i32
  }
  func.func @transform_3(%arg0: i32) -> (i32, i32) {
    %c0_i32 = arith.constant 0 : i32
    %c0_i32_0 = arith.constant 0 : i32
    %c0_i32_1 = arith.constant 0 : i32
    return %c0_i32, %c0_i32_0 : i32, i32
  }
  func.func @transform_4(%arg0: i32) -> (i32, i32) {
    %c0_i32 = arith.constant 0 : i32
    %c0_i32_0 = arith.constant 0 : i32
    %c0_i32_1 = arith.constant 0 : i32
    return %c0_i32, %c0_i32_0 : i32, i32
  }
  func.func @transform_5(%arg0: i32) -> (i32, i32) {
    %c0_i32 = arith.constant 0 : i32
    %c0_i32_0 = arith.constant 0 : i32
    return %arg0, %c0_i32 : i32, i32
  }
  func.func @transform_6(%arg0: i32) -> (i32, i32, i32) {
    %c0_i32 = arith.constant 0 : i32
    %c0_i32_0 = arith.constant 0 : i32
    %c0_i32_1 = arith.constant 0 : i32
    return %arg0, %c0_i32, %c0_i32_0 : i32, i32, i32
  }
}

</mosaic_0001>

<llo_original>
// kernel: tpu_custom_call.1
$region0: #{tpu_custom_call.1}
  #allocation0 [shape = 'u32[]', space=smem, size = 0x4, offset = 0x4, fixed_abs, tag = 'smem constant byte address 0x4 - core index']
  #allocation1 [shape = 'u32[144,128]{1,0:T(1,128)}', space=vmem, size = 0x12000, scoped, tag = 'internal scratch']
  #allocation2 [shape = 'f32[1,1]{1,0:T(1,128)S(1)}', space=vmem, size = 0x200, scoped, tag = 'scoped memory for tpu_custom_call.1']
  %s0 = inlined_call_operand.hbm [shape: f32[16,8,32], index: 0, kind: input, shape index: {}]
  %s1 = inlined_call_operand.vmem [shape: f32[32,16], index: 1, kind: input, shape index: {}]
  %s2 = inlined_call_operand.vmem [shape: f32[1,16], index: 2, kind: input, shape index: {}]
  %s3 = inlined_call_operand.vmem [shape: f32[1,16], index: 3, kind: input, shape index: {}]
  %s4 = inlined_call_operand.<no memory space> [shape: f32[1,1], index: 4, kind: input, shape index: {}]
  %s5 = inlined_call_operand.hbm [shape: f32[16,32], index: 5, kind: output, shape index: {0}]
  %s6 = inlined_call_operand.vmem [shape: f32[16,8,1], index: 6, kind: output, shape index: {1}]
  %7 = xla_tuple %s5, %s6
  %s8 = sld [smem:[#allocation0]]
  $region65: #{tpu_custom_call.1} parent=0
    _
  %s10 = ssub.s32 1, %s8
  %s11 = scalar_select 0, %s10, %s8
  %v12 = vstv %s4
  %13 = vst [vmem:[#allocation2] sm:$0x1] %v12
  $region1: #{tpu_custom_call.1} parent=0
    #allocation3 [shape = 'u8[65536]{0}', space=vmem, size = 0x10000, scoped, tag = 'input window, operand 0']
    #allocation4 [shape = 's32[2]{0}', space=sflag, size = 0x8, scoped, tag = 'scoped memory for tpu_custom_call.1']
    #allocation5 [shape = 's32[2]{0}', space=sflag, size = 0x8, scoped, tag = 'scoped memory for tpu_custom_call.1']
    #allocation6 [shape = 'u8[8192]{0}', space=vmem, size = 0x2000, scoped, tag = 'output window, operand 0']
    %14 = vsyncpa [#allocation4], 0
    %s15 = scalar_lea.sflag [#allocation4], 1
    %16 = vsyncpa %s15, 0
    %17 = vsyncpa [#allocation5], 0
    %s18 = scalar_lea.sflag [#allocation5], 1
    %19 = vsyncpa %s18, 0
    loop: start=0, step=1, limit=4
    $region2: #{tpu_custom_call.1} parent=1 // loop_pre_header
      _
    $region3: #{tpu_custom_call.1} parent=1 // loop_header
      %s21 = sphi 0, %s25
      %p22 = scmp.ge.s32.totalorder %s21, 4
      %s31 = sphi 0, %s33
      %s34 = sphi 0, %s31
      %s35 = sphi 0, %s34
      %s51 = sphi 0, %s35
      %s55 = sphi 0, %s55
      %s57 = sphi 0, %s55
      %s58 = sphi 0, %s57
      %s72 = sphi 0, %s58
      %s76 = sphi 0, %s76
      %s78 = sphi 0, %s76
      %s79 = sphi 0, %s78
      %s93 = sphi 0, %s79
      %s97 = sphi 0, %s97
      %s99 = sphi 0, %s97
      %s100 = sphi 0, %s99
      %s114 = sphi 0, %s100
      %s118 = sphi 0, %s118
      %s120 = sphi 0, %s118
      %s121 = sphi 0, %s120
      %s135 = sphi 0, %s121
      %s141 = sphi 0, %s143
      %s144 = sphi 0, %s141
      %s145 = sphi 0, %s144
      %s161 = sphi 0, %s145
      %s167 = sphi 0, %s169
      %s170 = sphi 0, %s167
      %s171 = sphi 0, %s170
      %s187 = sphi 0, %s171
    $region4: #{tpu_custom_call.1} parent=1 // loop_header_branch
      %24 = sbr.rel (%p22) target = $region8
    $region5: #{tpu_custom_call.1} parent=1 // loop_body
      %s26 = ssub.s32 %s21, 1
      %s27 = ssub.s32 %s21, 2
      %s28 = sadd.s32 %s21, 1
      %s29 = ssub.s32 %s21, %s28
      %p30 = scmp.eq.s32.totalorder %s29, 0
      %s32 = sadd.s32 %s31, 1
      %s33 = scalar_select %p30, %s31, %s32
      %p36 = pneg %p30
      %p37 = scmp.eq.s32.totalorder %s21, 1
      %p38 = por %p36, %p37
      %p39 = scmp.ne.s32.totalorder %s31, %s34
      %p40 = scmp.eq.s32.totalorder %s21, 0
      %p41 = por %p39, %p40
      %p42 = scmp.ne.s32.totalorder %s31, %s34
      %p43 = scmp.eq.s32.totalorder %s26, 1
      %p44 = por %p42, %p43
      %p45 = scmp.ne.s32.totalorder %s34, %s35
      %p46 = scmp.eq.s32.totalorder %s26, 0
      %p47 = por %p45, %p46
      %p48 = scmp.ne.s32.totalorder %s34, %s35
      %p49 = scmp.eq.s32.totalorder %s27, 1
      %p50 = por %p48, %p49
      %p52 = scmp.ne.s32.totalorder %s35, %s51
      %p53 = scmp.eq.s32.totalorder %s27, 0
      %p54 = por %p52, %p53
      %s56 = sadd.s32 %s55, 1
      %p59 = scmp.eq.s32.totalorder %s21, 1
      %p60 = scmp.ne.s32.totalorder %s55, %s57
      %p61 = scmp.eq.s32.totalorder %s21, 0
      %p62 = por %p60, %p61
      %p63 = scmp.ne.s32.totalorder %s55, %s57
      %p64 = scmp.eq.s32.totalorder %s26, 1
      %p65 = por %p63, %p64
      %p66 = scmp.ne.s32.totalorder %s57, %s58
      %p67 = scmp.eq.s32.totalorder %s26, 0
      %p68 = por %p66, %p67
      %p69 = scmp.ne.s32.totalorder %s57, %s58
      %p70 = scmp.eq.s32.totalorder %s27, 1
      %p71 = por %p69, %p70
      %p73 = scmp.ne.s32.totalorder %s58, %s72
      %p74 = scmp.eq.s32.totalorder %s27, 0
      %p75 = por %p73, %p74
      %s77 = sadd.s32 %s76, 1
      %p80 = scmp.eq.s32.totalorder %s21, 1
      %p81 = scmp.ne.s32.totalorder %s76, %s78
      %p82 = scmp.eq.s32.totalorder %s21, 0
      %p83 = por %p81, %p82
      %p84 = scmp.ne.s32.totalorder %s76, %s78
      %p85 = scmp.eq.s32.totalorder %s26, 1
      %p86 = por %p84, %p85
      %p87 = scmp.ne.s32.totalorder %s78, %s79
      %p88 = scmp.eq.s32.totalorder %s26, 0
      %p89 = por %p87, %p88
      %p90 = scmp.ne.s32.totalorder %s78, %s79
      %p91 = scmp.eq.s32.totalorder %s27, 1
      %p92 = por %p90, %p91
      %p94 = scmp.ne.s32.totalorder %s79, %s93
      %p95 = scmp.eq.s32.totalorder %s27, 0
      %p96 = por %p94, %p95
      %s98 = sadd.s32 %s97, 1
      %p101 = scmp.eq.s32.totalorder %s21, 1
      %p102 = scmp.ne.s32.totalorder %s97, %s99
      %p103 = scmp.eq.s32.totalorder %s21, 0
      %p104 = por %p102, %p103
      %p105 = scmp.ne.s32.totalorder %s97, %s99
      %p106 = scmp.eq.s32.totalorder %s26, 1
      %p107 = por %p105, %p106
      %p108 = scmp.ne.s32.totalorder %s99, %s100
      %p109 = scmp.eq.s32.totalorder %s26, 0
      %p110 = por %p108, %p109
      %p111 = scmp.ne.s32.totalorder %s99, %s100
      %p112 = scmp.eq.s32.totalorder %s27, 1
      %p113 = por %p111, %p112
      %p115 = scmp.ne.s32.totalorder %s100, %s114
      %p116 = scmp.eq.s32.totalorder %s27, 0
      %p117 = por %p115, %p116
      %s119 = sadd.s32 %s118, 1
      %p122 = scmp.eq.s32.totalorder %s21, 1
      %p123 = scmp.ne.s32.totalorder %s118, %s120
      %p124 = scmp.eq.s32.totalorder %s21, 0
      %p125 = por %p123, %p124
      %p126 = scmp.ne.s32.totalorder %s118, %s120
      %p127 = scmp.eq.s32.totalorder %s26, 1
      %p128 = por %p126, %p127
      %p129 = scmp.ne.s32.totalorder %s120, %s121
      %p130 = scmp.eq.s32.totalorder %s26, 0
      %p131 = por %p129, %p130
      %p132 = scmp.ne.s32.totalorder %s120, %s121
      %p133 = scmp.eq.s32.totalorder %s27, 1
      %p134 = por %p132, %p133
      %p136 = scmp.ne.s32.totalorder %s121, %s135
      %p137 = scmp.eq.s32.totalorder %s27, 0
      %p138 = por %p136, %p137
      %s139 = ssub.s32 %s21, %s28
      %p140 = scmp.eq.s32.totalorder %s139, 0
      %s142 = sadd.s32 %s141, 1
      %s143 = scalar_select %p140, %s141, %s142
      %p146 = pneg %p140
      %p147 = scmp.eq.s32.totalorder %s21, 1
      %p148 = por %p146, %p147
      %p149 = scmp.ne.s32.totalorder %s141, %s144
      %p150 = scmp.eq.s32.totalorder %s21, 0
      %p151 = por %p149, %p150
      %p152 = scmp.ne.s32.totalorder %s141, %s144
      %p153 = scmp.eq.s32.totalorder %s26, 1
      %p154 = por %p152, %p153
      %p155 = scmp.ne.s32.totalorder %s144, %s145
      %p156 = scmp.eq.s32.totalorder %s26, 0
      %p157 = por %p155, %p156
      %p158 = scmp.ne.s32.totalorder %s144, %s145
      %p159 = scmp.eq.s32.totalorder %s27, 1
      %p160 = por %p158, %p159
      %p162 = scmp.ne.s32.totalorder %s145, %s161
      %p163 = scmp.eq.s32.totalorder %s27, 0
      %p164 = por %p162, %p163
      %s165 = ssub.s32 %s21, %s28
      %p166 = scmp.eq.s32.totalorder %s165, 0
      %s168 = sadd.s32 %s167, 1
      %s169 = scalar_select %p166, %s167, %s168
      %p172 = pneg %p166
      %p173 = scmp.eq.s32.totalorder %s21, 1
      %p174 = por %p172, %p173
      %p175 = scmp.ne.s32.totalorder %s167, %s170
      %p176 = scmp.eq.s32.totalorder %s21, 0
      %p177 = por %p175, %p176
      %p178 = scmp.ne.s32.totalorder %s167, %s170
      %p179 = scmp.eq.s32.totalorder %s26, 1
      %p180 = por %p178, %p179
      %p181 = scmp.ne.s32.totalorder %s170, %s171
      %p182 = scmp.eq.s32.totalorder %s26, 0
      %p183 = por %p181, %p182
      %p184 = scmp.ne.s32.totalorder %s170, %s171
      %p185 = scmp.eq.s32.totalorder %s27, 1
      %p186 = por %p184, %p185
      %p188 = scmp.ne.s32.totalorder %s171, %s187
      %p189 = scmp.eq.s32.totalorder %s27, 0
      %p190 = por %p188, %p189
      %p191 = scmp.le.s32.totalorder 1, %s21
      %p192 = scmp.lt.s32.totalorder %s21, 3
      %p193 = pnand %p191, %p192
      %p194 = pneg %p193
      // Predicated region
      $region9: #{tpu_custom_call.1} parent=5 // pred_check
        _
      $region10: #{tpu_custom_call.1} parent=5 // pred_check_branch
        %196 = sbr.rel (%p193) target = $region12
      $region11: #{tpu_custom_call.1} parent=5 // pred_region
        %s197 = ssub.s32 %s21, 1
        // Predicated region
        $region13: #{tpu_custom_call.1} parent=11 // pred_check
          %p198 = pneg %p68
        $region14: #{tpu_custom_call.1} parent=11 // pred_check_branch
          %200 = sbr.rel (%p198) target = $region16
        $region15: #{tpu_custom_call.1} parent=11 // pred_region
          _
        $region16: #{tpu_custom_call.1} parent=11 // pred_fallthru
          _
        // Predicated region
        $region17: #{tpu_custom_call.1} parent=11 // pred_check
          %p201 = pneg %p89
        $region18: #{tpu_custom_call.1} parent=11 // pred_check_branch
          %203 = sbr.rel (%p201) target = $region20
        $region19: #{tpu_custom_call.1} parent=11 // pred_region
          _
        $region20: #{tpu_custom_call.1} parent=11 // pred_fallthru
          _
        // Predicated region
        $region21: #{tpu_custom_call.1} parent=11 // pred_check
          %p204 = pneg %p110
        $region22: #{tpu_custom_call.1} parent=11 // pred_check_branch
          %206 = sbr.rel (%p204) target = $region24
        $region23: #{tpu_custom_call.1} parent=11 // pred_region
          _
        $region24: #{tpu_custom_call.1} parent=11 // pred_fallthru
          _
        // Predicated region
        $region25: #{tpu_custom_call.1} parent=11 // pred_check
          %p207 = pneg %p131
        $region26: #{tpu_custom_call.1} parent=11 // pred_check_branch
          %209 = sbr.rel (%p207) target = $region28
        $region27: #{tpu_custom_call.1} parent=11 // pred_region
          _
        $region28: #{tpu_custom_call.1} parent=11 // pred_fallthru
          _
      $region12: #{tpu_custom_call.1} parent=5 // pred_fallthru
        _
      %p210 = scmp.lt.s32.totalorder %s21, 2
      // Predicated region
      $region29: #{tpu_custom_call.1} parent=5 // pred_check
        %p211 = pneg %p210
      $region30: #{tpu_custom_call.1} parent=5 // pred_check_branch
        %213 = sbr.rel (%p211) target = $region32
      $region31: #{tpu_custom_call.1} parent=5 // pred_region
        // Predicated region
        $region33: #{tpu_custom_call.1} parent=31 // pred_check
          %p214 = pneg %p41
        $region34: #{tpu_custom_call.1} parent=31 // pred_check_branch
          %216 = sbr.rel (%p214) target = $region36
        $region35: #{tpu_custom_call.1} parent=31 // pred_region
          %s217 = sand.u32 %s31, 1
          %s218 = scalar_lea.sflag [#allocation4], %s217
          %s219 = sand.u32 %s31, 1
          %s220 = smul.addr %s219, 64
          %s221 = scalar_lea.vmem [#allocation3], %s220
          %s222 = smul.u32 8, %s21
          %s224 = ssub.s32 1024, 1024
          %225 = vsyncadd %s218, %s224
          %s226 = smul.addr %s222, 128
          %s227 = scalar_lea.hbm %s0, %s226
          %s228 = sshll.u32 %s221, 4
          %s229 = int_to_ptr.vmem [resolvable:$true] %s228
          %234 = dma.hbm_to_vmem [thread:$0]  %s227, 1024, %s229, %s218, 128, 128, 8
        $region36: #{tpu_custom_call.1} parent=31 // pred_fallthru
          _
      $region32: #{tpu_custom_call.1} parent=5 // pred_fallthru
        _
      %p235 = scmp.le.s32.totalorder 1, %s21
      %p236 = scmp.lt.s32.totalorder %s21, 3
      %p237 = pnand %p235, %p236
      %p238 = pneg %p237
      // Predicated region
      $region37: #{tpu_custom_call.1} parent=5 // pred_check
        _
      $region38: #{tpu_custom_call.1} parent=5 // pred_check_branch
        %240 = sbr.rel (%p237) target = $region40
      $region39: #{tpu_custom_call.1} parent=5 // pred_region
        %s241 = ssub.s32 %s21, 1
        %s242 = sand.u32 %s34, 1
        %s243 = scalar_lea.sflag [#allocation4], %s242
        %s244 = sand.u32 %s34, 1
        %s245 = smul.addr %s244, 64
        %s246 = scalar_lea.vmem [#allocation3], %s245
        // Predicated region
        $region41: #{tpu_custom_call.1} parent=39 // pred_check
          %p247 = pneg %p47
        $region42: #{tpu_custom_call.1} parent=39 // pred_check_branch
          %249 = sbr.rel (%p247) target = $region44
        $region43: #{tpu_custom_call.1} parent=39 // pred_region
          %250 = dma.done %s243, 1024
        $region44: #{tpu_custom_call.1} parent=39 // pred_fallthru
          _
        %s251 = sand.u32 %s34, 1
        %s252 = scalar_lea.sflag [#allocation4], %s251
        %s253 = sand.u32 %s34, 1
        %s254 = smul.addr %s253, 64
        %s255 = scalar_lea.vmem [#allocation3], %s254
        %p256 = pneg %p47
        %p257 = pneg %p44
        %p258 = pneg %p68
        %p259 = pneg %p65
        %p260 = pneg %p89
        %p261 = pneg %p86
        %p262 = pneg %p110
        %p263 = pneg %p107
        %p264 = pneg %p131
        %p265 = pneg %p128
        %p266 = pneg %p157
        %p267 = pneg %p154
        %s268 = sand.u32 %s144, 1
        %s269 = scalar_lea.sflag [#allocation5], %s268
        %s270 = sand.u32 %s144, 1
        %s271 = smul.addr %s270, 8
        %s272 = scalar_lea.vmem [#allocation6], %s271
        %p273 = pneg %p183
        %p274 = pneg %p180
        %s275 = smul.u32 8, %s26
        %p276 = scmp.lt.s32.totalorder %s275, 15
        %s277 = scalar_select %p276, %s275, 15
        %s278 = smul.addr %s277, 8
        %s279 = scalar_lea.vmem %s6, %s278
        %s280 = smul.u32 8, %s26
        %s281 = smul.u32 8, %s26
        %p282 = scmp.lt.s32.totalorder %s281, 15
        %s283 = scalar_select %p282, %s281, 15
        %s284 = smul.addr %s283, 8
        %s285 = scalar_lea.vmem %s6, %s284
        %s286 = smul.u32 8, %s26
        %v287 = vld [vmem:[%s246] sm:$0xff]
        %v288 = vld [vmem:[%s246 + $0x8] sm:$0xff]
        %v289 = vld [vmem:[%s246 + $0x10] sm:$0xff]
        %v290 = vld [vmem:[%s246 + $0x18] sm:$0xff]
        %v291 = vld [vmem:[%s246 + $0x20] sm:$0xff]
        %v292 = vld [vmem:[%s246 + $0x28] sm:$0xff]
        %v293 = vld [vmem:[%s246 + $0x30] sm:$0xff]
        %v294 = vld [vmem:[%s246 + $0x38] sm:$0xff]
        %v295 = vld [vmem:[%s1] sm:$0xff]
        %v296 = vld [vmem:[%s1 + $0x8] sm:$0xff]
        %v297 = vld [vmem:[%s1 + $0x10] sm:$0xff]
        %v298 = vld [vmem:[%s1 + $0x18] sm:$0xff]
        %v299 = vld [vmem:[%s2] sm:$0x1]
        %v300 = vld [vmem:[%s3] sm:$0x1]
        %v301 = vld [vmem:[#allocation2] sm:$0x1]
        %v303 = vlaneseq
        %v304 = vshrl.u32 %v303, 7
        %v305 = vsub.s32 0, %v304
        %v306 = vrot.slane %v299, %v305
        %vm308 = vcmask 261120
        %v310 = vsel %vm308, %v287, 0
        %v313 = vsel %vm308, %v288, 0
        %v316 = vsel %vm308, %v289, 0
        %v319 = vsel %vm308, %v290, 0
        %v322 = vsel %vm308, %v291, 0
        %v325 = vsel %vm308, %v292, 0
        %v328 = vsel %vm308, %v293, 0
        %v331 = vsel %vm308, %v294, 0
        %333 = vmatprep.subr.mxu0 0.0
        %334 = vmatpush1.msra.mxu0 0.0
        %335 = vmatprep.subr.mxu0 0.0
        %336 = vmatpush1.msra.mxu0 0.0
        %337 = vmatprep.subr.mxu0 0.0
        %338 = vmatpush1.msra.mxu0 0.0
        %339 = vmatprep.subr.mxu0 0.0
        %340 = vmatpush1.msra.mxu0 0.0
        %341 = vmatprep.subr.mxu0 0.0
        %342 = vmatpush1.msra.mxu0 0.0
        %343 = vmatprep.subr.mxu0 0.0
        %344 = vmatpush1.msra.mxu0 0.0
        %345 = vmatprep.subr.mxu0 0.0
        %346 = vmatpush1.msra.mxu0 0.0
        %347 = vmatprep.subr.mxu0 0.0
        %348 = vmatpush1.msra.mxu0 0.0
        %349 = vmatprep.subr.mxu0 0.0
        %350 = vmatpush1.msra.mxu0 0.0
        %351 = vmatprep.subr.mxu0 0.0
        %352 = vmatpush1.msra.mxu0 0.0
        %353 = vmatprep.subr.mxu0 0.0
        %354 = vmatpush1.msra.mxu0 0.0
        %355 = vmatprep.subr.mxu0 0.0
        %356 = vmatpush1.msra.mxu0 0.0
        %357 = vmatprep.subr.mxu0 0.0
        %358 = vmatpush1.msra.mxu0 %v298
        %359 = vmatprep.subr.mxu0 0.0
        %360 = vmatpush1.msra.mxu0 %v297
        %361 = vmatprep.subr.mxu0 0.0
        %362 = vmatpush1.msra.mxu0 %v296
        %363 = vmatprep.subr.mxu0 0.0
        %364 = vmatpush1.msra.mxu0 %v295
        %365 = vmatprep.subr.mxu0 0.0
        %366 = vmatpush2.msra.mxu0 0.0
        %367 = vmatprep.subr.mxu0 0.0
        %368 = vmatpush2.msra.mxu0 0.0
        %369 = vmatprep.subr.mxu0 0.0
        %370 = vmatpush2.msra.mxu0 0.0
        %371 = vmatprep.subr.mxu0 0.0
        %372 = vmatpush2.msra.mxu0 0.0
        %373 = vmatprep.subr.mxu0 0.0
        %374 = vmatpush2.msra.mxu0 0.0
        %375 = vmatprep.subr.mxu0 0.0
        %376 = vmatpush2.msra.mxu0 0.0
        %377 = vmatprep.subr.mxu0 0.0
        %378 = vmatpush2.msra.mxu0 0.0
        %379 = vmatprep.subr.mxu0 0.0
        %380 = vmatpush2.msra.mxu0 0.0
        %381 = vmatprep.subr.mxu0 0.0
        %382 = vmatpush2.msra.mxu0 0.0
        %383 = vmatprep.subr.mxu0 0.0
        %384 = vmatpush2.msra.mxu0 0.0
        %385 = vmatprep.subr.mxu0 0.0
        %386 = vmatpush2.msra.mxu0 0.0
        %387 = vmatprep.subr.mxu0 0.0
        %388 = vmatpush2.msra.mxu0 0.0
        %389 = vmatprep.subr.mxu0 0.0
        %390 = vmatpush2.msra.mxu0 0.0
        %391 = vmatprep.subr.mxu0 0.0
        %392 = vmatpush2.msra.mxu0 0.0
        %393 = vmatprep.subr.mxu0 0.0
        %394 = vmatpush2.msra.mxu0 0.0
        %395 = vmatprep.subr.mxu0 0.0
        %396 = vmatpush2.msra.mxu0 0.0
        %397 = vmatprep.mubr.f32.mxu0 0.0
        %398 = vmatmul.mubr.f32.gmra.mxu0 %v310
        %v399 = vpop.f32.mrf.mxu0
        %v400 = vadd.f32 %v306, %v399
        %v401 = vpop.f32.mrf.mxu0
        %402 = vmatprep.mubr.f32.mxu0 0.0
        %403 = vmatmul.mubr.f32.gmra.mxu0 %v313
        %v404 = vpop.f32.mrf.mxu0
        %v405 = vadd.f32 %v306, %v404
        %v406 = vpop.f32.mrf.mxu0
        %407 = vmatprep.mubr.f32.mxu0 0.0
        %408 = vmatmul.mubr.f32.gmra.mxu0 %v316
        %v409 = vpop.f32.mrf.mxu0
        %v410 = vadd.f32 %v306, %v409
        %v411 = vpop.f32.mrf.mxu0
        %412 = vmatprep.mubr.f32.mxu0 0.0
        %413 = vmatmul.mubr.f32.gmra.mxu0 %v319
        %v414 = vpop.f32.mrf.mxu0
        %v415 = vadd.f32 %v306, %v414
        %v416 = vpop.f32.mrf.mxu0
        %417 = vmatprep.mubr.f32.mxu0 0.0
        %418 = vmatmul.mubr.f32.gmra.mxu0 %v322
        %v419 = vpop.f32.mrf.mxu0
        %v420 = vadd.f32 %v306, %v419
        %v421 = vpop.f32.mrf.mxu0
        %422 = vmatprep.mubr.f32.mxu0 0.0
        %423 = vmatmul.mubr.f32.gmra.mxu0 %v325
        %v424 = vpop.f32.mrf.mxu0
        %v425 = vadd.f32 %v306, %v424
        %v426 = vpop.f32.mrf.mxu0
        %427 = vmatprep.mubr.f32.mxu0 0.0
        %428 = vmatmul.mubr.f32.gmra.mxu0 %v328
        %v429 = vpop.f32.mrf.mxu0
        %v430 = vadd.f32 %v306, %v429
        %v431 = vpop.f32.mrf.mxu0
        %432 = vmatprep.mubr.f32.mxu0 0.0
        %433 = vmatmul.mubr.f32.gmra.mxu0 %v331
        %v434 = vpop.f32.mrf.mxu0
        %v435 = vadd.f32 %v306, %v434
        %v436 = vpop.f32.mrf.mxu0
        %437 = vdwg.mxu0
        %v438 = vtanh.pop %v400
        %v439 = vtanh.pop %v405
        %v440 = vtanh.pop %v410
        %v441 = vtanh.pop %v415
        %v442 = vtanh.pop %v420
        %v443 = vtanh.pop %v425
        %v444 = vtanh.pop %v430
        %v445 = vtanh.pop %v435
        %v447 = vlaneseq
        %v448 = vshrl.u32 %v447, 7
        %v449 = vsub.s32 0, %v448
        %v450 = vrot.slane %v300, %v449
        %v452 = vmul.f32 %v438, %v450
        %v453 = vmul.f32 %v439, %v450
        %v454 = vmul.f32 %v440, %v450
        %v455 = vmul.f32 %v441, %v450
        %v456 = vmul.f32 %v442, %v450
        %v457 = vmul.f32 %v443, %v450
        %v458 = vmul.f32 %v444, %v450
        %v459 = vmul.f32 %v445, %v450
        %vm460 = vcmask 130048
        %v461 = vsel %vm460, %v452, 0.0
        %462 = vadd.xlane.f32.xlu0 %v461
        %v463 = vpop.xlane.xlu0 %462
        %v464 = vsel %vm460, %v453, 0.0
        %465 = vadd.xlane.f32.xlu0 %v464
        %v466 = vpop.xlane.xlu0 %465
        %v467 = vsel %vm460, %v454, 0.0
        %468 = vadd.xlane.f32.xlu0 %v467
        %v469 = vpop.xlane.xlu0 %468
        %v470 = vsel %vm460, %v455, 0.0
        %471 = vadd.xlane.f32.xlu0 %v470
        %v472 = vpop.xlane.xlu0 %471
        %v473 = vsel %vm460, %v456, 0.0
        %474 = vadd.xlane.f32.xlu0 %v473
        %v475 = vpop.xlane.xlu0 %474
        %v476 = vsel %vm460, %v457, 0.0
        %477 = vadd.xlane.f32.xlu0 %v476
        %v478 = vpop.xlane.xlu0 %477
        %v479 = vsel %vm460, %v458, 0.0
        %480 = vadd.xlane.f32.xlu0 %v479
        %v481 = vpop.xlane.xlu0 %480
        %v482 = vsel %vm460, %v459, 0.0
        %483 = vadd.xlane.f32.xlu0 %v482
        %v484 = vpop.xlane.xlu0 %483
        %v486 = vlaneseq
        %v487 = vshrl.u32 %v486, 7
        %v488 = vsub.s32 0, %v487
        %v489 = vrot.slane %v301, %v488
        %v491 = vadd.f32 %v463, %v489
        %v492 = vadd.f32 %v466, %v489
        %v493 = vadd.f32 %v469, %v489
        %v494 = vadd.f32 %v472, %v489
        %v495 = vadd.f32 %v475, %v489
        %v496 = vadd.f32 %v478, %v489
        %v497 = vadd.f32 %v481, %v489
        %v498 = vadd.f32 %v484, %v489
        %vm499 = vcmask 7168
        %v500 = vsel %vm499, %v491, -inf
        %v501 = vrot.slane %v500, 4
        %v502 = vmax.f32 %v500, %v501
        %v503 = vrot.slane %v502, 2
        %v504 = vmax.f32 %v502, %v503
        %v505 = vrot.slane %v504, 1
        %v506 = vmax.f32 %v504, %v505
        %v507 = vsel %vm499, %v492, -inf
        %v508 = vrot.slane %v507, 4
        %v509 = vmax.f32 %v507, %v508
        %v510 = vrot.slane %v509, 2
        %v511 = vmax.f32 %v509, %v510
        %v512 = vrot.slane %v511, 1
        %v513 = vmax.f32 %v511, %v512
        %v514 = vsel %vm499, %v493, -inf
        %v515 = vrot.slane %v514, 4
        %v516 = vmax.f32 %v514, %v515
        %v517 = vrot.slane %v516, 2
        %v518 = vmax.f32 %v516, %v517
        %v519 = vrot.slane %v518, 1
        %v520 = vmax.f32 %v518, %v519
        %v521 = vsel %vm499, %v494, -inf
        %v522 = vrot.slane %v521, 4
        %v523 = vmax.f32 %v521, %v522
        %v524 = vrot.slane %v523, 2
        %v525 = vmax.f32 %v523, %v524
        %v526 = vrot.slane %v525, 1
        %v527 = vmax.f32 %v525, %v526
        %v528 = vsel %vm499, %v495, -inf
        %v529 = vrot.slane %v528, 4
        %v530 = vmax.f32 %v528, %v529
        %v531 = vrot.slane %v530, 2
        %v532 = vmax.f32 %v530, %v531
        %v533 = vrot.slane %v532, 1
        %v534 = vmax.f32 %v532, %v533
        %v535 = vsel %vm499, %v496, -inf
        %v536 = vrot.slane %v535, 4
        %v537 = vmax.f32 %v535, %v536
        %v538 = vrot.slane %v537, 2
        %v539 = vmax.f32 %v537, %v538
        %v540 = vrot.slane %v539, 1
        %v541 = vmax.f32 %v539, %v540
        %v542 = vsel %vm499, %v497, -inf
        %v543 = vrot.slane %v542, 4
        %v544 = vmax.f32 %v542, %v543
        %v545 = vrot.slane %v544, 2
        %v546 = vmax.f32 %v544, %v545
        %v547 = vrot.slane %v546, 1
        %v548 = vmax.f32 %v546, %v547
        %v549 = vsel %vm499, %v498, -inf
        %v550 = vrot.slane %v549, 4
        %v551 = vmax.f32 %v549, %v550
        %v552 = vrot.slane %v551, 2
        %v553 = vmax.f32 %v551, %v552
        %v554 = vrot.slane %v553, 1
        %v555 = vmax.f32 %v553, %v554
        %v556 = vsub.f32 %v491, %v506
        %v557 = vsub.f32 %v492, %v513
        %v558 = vsub.f32 %v493, %v520
        %v559 = vsub.f32 %v494, %v527
        %v560 = vsub.f32 %v495, %v534
        %v561 = vsub.f32 %v496, %v541
        %v562 = vsub.f32 %v497, %v548
        %v563 = vsub.f32 %v498, %v555
        %v564 = vmul.f32 %v556, 1.442695
        %v565 = vpow.pop %v564
        %v566 = vmul.f32 %v557, 1.442695
        %v567 = vpow.pop %v566
        %v568 = vmul.f32 %v558, 1.442695
        %v569 = vpow.pop %v568
        %v570 = vmul.f32 %v559, 1.442695
        %v571 = vpow.pop %v570
        %v572 = vmul.f32 %v560, 1.442695
        %v573 = vpow.pop %v572
        %v574 = vmul.f32 %v561, 1.442695
        %v575 = vpow.pop %v574
        %v576 = vmul.f32 %v562, 1.442695
        %v577 = vpow.pop %v576
        %v578 = vmul.f32 %v563, 1.442695
        %v579 = vpow.pop %v578
        %v580 = vsel %vm499, %v565, 0.0
        %v581 = vrot.slane %v580, 4
        %v582 = vadd.f32 %v580, %v581
        %v583 = vrot.slane %v582, 2
        %v584 = vadd.f32 %v582, %v583
        %v585 = vrot.slane %v584, 1
        %v586 = vadd.f32 %v584, %v585
        %v587 = vsel %vm499, %v567, 0.0
        %v588 = vrot.slane %v587, 4
        %v589 = vadd.f32 %v587, %v588
        %v590 = vrot.slane %v589, 2
        %v591 = vadd.f32 %v589, %v590
        %v592 = vrot.slane %v591, 1
        %v593 = vadd.f32 %v591, %v592
        %v594 = vsel %vm499, %v569, 0.0
        %v595 = vrot.slane %v594, 4
        %v596 = vadd.f32 %v594, %v595
        %v597 = vrot.slane %v596, 2
        %v598 = vadd.f32 %v596, %v597
        %v599 = vrot.slane %v598, 1
        %v600 = vadd.f32 %v598, %v599
        %v601 = vsel %vm499, %v571, 0.0
        %v602 = vrot.slane %v601, 4
        %v603 = vadd.f32 %v601, %v602
        %v604 = vrot.slane %v603, 2
        %v605 = vadd.f32 %v603, %v604
        %v606 = vrot.slane %v605, 1
        %v607 = vadd.f32 %v605, %v606
        %v608 = vsel %vm499, %v573, 0.0
        %v609 = vrot.slane %v608, 4
        %v610 = vadd.f32 %v608, %v609
        %v611 = vrot.slane %v610, 2
        %v612 = vadd.f32 %v610, %v611
        %v613 = vrot.slane %v612, 1
        %v614 = vadd.f32 %v612, %v613
        %v615 = vsel %vm499, %v575, 0.0
        %v616 = vrot.slane %v615, 4
        %v617 = vadd.f32 %v615, %v616
        %v618 = vrot.slane %v617, 2
        %v619 = vadd.f32 %v617, %v618
        %v620 = vrot.slane %v619, 1
        %v621 = vadd.f32 %v619, %v620
        %v622 = vsel %vm499, %v577, 0.0
        %v623 = vrot.slane %v622, 4
        %v624 = vadd.f32 %v622, %v623
        %v625 = vrot.slane %v624, 2
        %v626 = vadd.f32 %v624, %v625
        %v627 = vrot.slane %v626, 1
        %v628 = vadd.f32 %v626, %v627
        %v629 = vsel %vm499, %v579, 0.0
        %v630 = vrot.slane %v629, 4
        %v631 = vadd.f32 %v629, %v630
        %v632 = vrot.slane %v631, 2
        %v633 = vadd.f32 %v631, %v632
        %v634 = vrot.slane %v633, 1
        %v635 = vadd.f32 %v633, %v634
        %v636 = vrcp.pop %v586
        %v637 = vmul.f32 %v565, %v636
        %v638 = vrcp.pop %v593
        %v639 = vmul.f32 %v567, %v638
        %v640 = vrcp.pop %v600
        %v641 = vmul.f32 %v569, %v640
        %v642 = vrcp.pop %v607
        %v643 = vmul.f32 %v571, %v642
        %v644 = vrcp.pop %v614
        %v645 = vmul.f32 %v573, %v644
        %v646 = vrcp.pop %v621
        %v647 = vmul.f32 %v575, %v646
        %v648 = vrcp.pop %v628
        %v649 = vmul.f32 %v577, %v648
        %v650 = vrcp.pop %v635
        %v651 = vmul.f32 %v579, %v650
        %653 = vset.pattern.permute.xlu0 0
        %654 = vperm.xlu0 %653, %v637
        %v655 = vpop.permute.xlu0 %654
        %658 = vset.pattern.permute.xlu0 0
        %659 = vperm.xlu0 %658, %v639
        %v660 = vpop.permute.xlu0 %659
        %663 = vset.pattern.permute.xlu0 0
        %664 = vperm.xlu0 %663, %v641
        %v665 = vpop.permute.xlu0 %664
        %668 = vset.pattern.permute.xlu0 0
        %669 = vperm.xlu0 %668, %v643
        %v670 = vpop.permute.xlu0 %669
        %673 = vset.pattern.permute.xlu0 0
        %674 = vperm.xlu0 %673, %v645
        %v675 = vpop.permute.xlu0 %674
        %678 = vset.pattern.permute.xlu0 0
        %679 = vperm.xlu0 %678, %v647
        %v680 = vpop.permute.xlu0 %679
        %683 = vset.pattern.permute.xlu0 0
        %684 = vperm.xlu0 %683, %v649
        %v685 = vpop.permute.xlu0 %684
        %688 = vset.pattern.permute.xlu0 0
        %689 = vperm.xlu0 %688, %v651
        %v690 = vpop.permute.xlu0 %689
        %v692 = vmul.f32 %v287, %v655
        %v693 = vmul.f32 %v288, %v660
        %v694 = vmul.f32 %v289, %v665
        %v695 = vmul.f32 %v290, %v670
        %v696 = vmul.f32 %v291, %v675
        %v697 = vmul.f32 %v292, %v680
        %v698 = vmul.f32 %v293, %v685
        %v699 = vmul.f32 %v294, %v690
        %v700 = vsel %vm308, %v692, 0.0
        %v701 = vrot.slane %v700, 4
        %v702 = vadd.f32 %v700, %v701
        %v703 = vrot.slane %v702, 2
        %v704 = vadd.f32 %v702, %v703
        %v705 = vrot.slane %v704, 1
        %v706 = vadd.f32 %v704, %v705
        %v707 = vsel %vm308, %v693, 0.0
        %v708 = vrot.slane %v707, 4
        %v709 = vadd.f32 %v707, %v708
        %v710 = vrot.slane %v709, 2
        %v711 = vadd.f32 %v709, %v710
        %v712 = vrot.slane %v711, 1
        %v713 = vadd.f32 %v711, %v712
        %v714 = vsel %vm308, %v694, 0.0
        %v715 = vrot.slane %v714, 4
        %v716 = vadd.f32 %v714, %v715
        %v717 = vrot.slane %v716, 2
        %v718 = vadd.f32 %v716, %v717
        %v719 = vrot.slane %v718, 1
        %v720 = vadd.f32 %v718, %v719
        %v721 = vsel %vm308, %v695, 0.0
        %v722 = vrot.slane %v721, 4
        %v723 = vadd.f32 %v721, %v722
        %v724 = vrot.slane %v723, 2
        %v725 = vadd.f32 %v723, %v724
        %v726 = vrot.slane %v725, 1
        %v727 = vadd.f32 %v725, %v726
        %v728 = vsel %vm308, %v696, 0.0
        %v729 = vrot.slane %v728, 4
        %v730 = vadd.f32 %v728, %v729
        %v731 = vrot.slane %v730, 2
        %v732 = vadd.f32 %v730, %v731
        %v733 = vrot.slane %v732, 1
        %v734 = vadd.f32 %v732, %v733
        %v735 = vsel %vm308, %v697, 0.0
        %v736 = vrot.slane %v735, 4
        %v737 = vadd.f32 %v735, %v736
        %v738 = vrot.slane %v737, 2
        %v739 = vadd.f32 %v737, %v738
        %v740 = vrot.slane %v739, 1
        %v741 = vadd.f32 %v739, %v740
        %v742 = vsel %vm308, %v698, 0.0
        %v743 = vrot.slane %v742, 4
        %v744 = vadd.f32 %v742, %v743
        %v745 = vrot.slane %v744, 2
        %v746 = vadd.f32 %v744, %v745
        %v747 = vrot.slane %v746, 1
        %v748 = vadd.f32 %v746, %v747
        %v749 = vsel %vm308, %v699, 0.0
        %v750 = vrot.slane %v749, 4
        %v751 = vadd.f32 %v749, %v750
        %v752 = vrot.slane %v751, 2
        %v753 = vadd.f32 %v751, %v752
        %v754 = vrot.slane %v753, 1
        %v755 = vadd.f32 %v753, %v754
        %vm764 = vcmask 1041409
        %v765 = vsel %vm764, %v713, %v706
        %vm766 = vcmask 1042434
        %v767 = vsel %vm766, %v720, %v765
        %vm768 = vcmask 1043459
        %v769 = vsel %vm768, %v727, %v767
        %vm770 = vcmask 1044484
        %v771 = vsel %vm770, %v734, %v769
        %vm772 = vcmask 1045509
        %v773 = vsel %vm772, %v741, %v771
        %vm774 = vcmask 1046534
        %v775 = vsel %vm774, %v748, %v773
        %vm776 = vcmask 1047559
        %v777 = vsel %vm776, %v755, %v775
        %779 = vst.msk [vmem:[%s272] sm:$0xff] %vm308, %v777
        %780 = vst.msk [vmem:[%s285] sm:$0xff] %vm499, %v637
        %781 = vst.msk [vmem:[%s285 + $0x8] sm:$0xff] %vm499, %v639
        %782 = vst.msk [vmem:[%s285 + $0x10] sm:$0xff] %vm499, %v641
        %783 = vst.msk [vmem:[%s285 + $0x18] sm:$0xff] %vm499, %v643
        %784 = vst.msk [vmem:[%s285 + $0x20] sm:$0xff] %vm499, %v645
        %785 = vst.msk [vmem:[%s285 + $0x28] sm:$0xff] %vm499, %v647
        %786 = vst.msk [vmem:[%s285 + $0x30] sm:$0xff] %vm499, %v649
        %787 = vst.msk [vmem:[%s285 + $0x38] sm:$0xff] %vm499, %v651
        %s788 = sand.u32 %s144, 1
        %s789 = scalar_lea.sflag [#allocation5], %s788
        %s790 = sand.u32 %s144, 1
        %s791 = smul.addr %s790, 8
        %s792 = scalar_lea.vmem [#allocation6], %s791
        %s793 = smul.u32 8, %s26
        %p794 = scmp.lt.s32.totalorder %s793, 15
        %s795 = scalar_select %p794, %s793, 15
        %s796 = smul.addr %s795, 8
        %s797 = scalar_lea.vmem %s6, %s796
        // Predicated region
        $region45: #{tpu_custom_call.1} parent=39 // pred_check
          %p798 = pneg %p154
        $region46: #{tpu_custom_call.1} parent=39 // pred_check_branch
          %800 = sbr.rel (%p798) target = $region48
        $region47: #{tpu_custom_call.1} parent=39 // pred_region
          %s802 = ssub.s32 128, 128
          %803 = vsyncadd %s789, %s802
          %s804 = smul.addr %s26, 128
          %s805 = scalar_lea.hbm %s5, %s804
          %s807 = sshll.u32 %s792, 4
          %s808 = int_to_ptr.vmem [resolvable:$true] %s807
          %810 = dma.vmem_to_hbm [thread:$0]  %s808, 128, %s805, %s789
        $region48: #{tpu_custom_call.1} parent=39 // pred_fallthru
          _
        // Predicated region
        $region49: #{tpu_custom_call.1} parent=39 // pred_check
          %p811 = pneg %p180
        $region50: #{tpu_custom_call.1} parent=39 // pred_check_branch
          %813 = sbr.rel (%p811) target = $region52
        $region51: #{tpu_custom_call.1} parent=39 // pred_region
          %s814 = smul.u32 8, %s26
        $region52: #{tpu_custom_call.1} parent=39 // pred_fallthru
          _
      $region40: #{tpu_custom_call.1} parent=5 // pred_fallthru
        _
      %p815 = scmp.le.s32.totalorder 2, %s21
      // Predicated region
      $region53: #{tpu_custom_call.1} parent=5 // pred_check
        %p816 = pneg %p815
      $region54: #{tpu_custom_call.1} parent=5 // pred_check_branch
        %818 = sbr.rel (%p816) target = $region56
      $region55: #{tpu_custom_call.1} parent=5 // pred_region
        %s819 = ssub.s32 %s21, 2
        // Predicated region
        $region57: #{tpu_custom_call.1} parent=55 // pred_check
          %p820 = pneg %p160
        $region58: #{tpu_custom_call.1} parent=55 // pred_check_branch
          %822 = sbr.rel (%p820) target = $region60
        $region59: #{tpu_custom_call.1} parent=55 // pred_region
          %s823 = sand.u32 %s145, 1
          %s824 = scalar_lea.sflag [#allocation5], %s823
          %s825 = sand.u32 %s145, 1
          %s826 = smul.addr %s825, 8
          %s827 = scalar_lea.vmem [#allocation6], %s826
          %828 = dma.done %s824, 128
        $region60: #{tpu_custom_call.1} parent=55 // pred_fallthru
          _
        // Predicated region
        $region61: #{tpu_custom_call.1} parent=55 // pred_check
          %p829 = pneg %p186
        $region62: #{tpu_custom_call.1} parent=55 // pred_check_branch
          %831 = sbr.rel (%p829) target = $region64
        $region63: #{tpu_custom_call.1} parent=55 // pred_region
          %s832 = smul.u32 8, %s27
          %p833 = scmp.lt.s32.totalorder %s832, 15
          %s834 = scalar_select %p833, %s832, 15
          %s835 = smul.addr %s834, 8
          %s836 = scalar_lea.vmem %s6, %s835
        $region64: #{tpu_custom_call.1} parent=55 // pred_fallthru
          _
      $region56: #{tpu_custom_call.1} parent=5 // pred_fallthru
        _
    $region6: #{tpu_custom_call.1} parent=1 // loop_footer
      %s25 = sadd.s32 1, %s21
    $region7: #{tpu_custom_call.1} parent=1 // loop_footer_branch
      %20 = sbr.rel target = $region3
    $region8: #{tpu_custom_call.1} parent=1 // loop_exit
      _
    %837 = vsyncpa [#allocation4], 1
    %s838 = scalar_lea.sflag [#allocation4], 1
    %839 = vsyncpa %s838, 1
    %840 = vsyncpa [#allocation5], 1
    %s841 = scalar_lea.sflag [#allocation5], 1
    %842 = vsyncpa %s841, 1

</llo_original>
